<compile_context>
chip_gen: v7x
topology: tpu7x:2x2x1
jax: 0.10.0
libtpu: 0.0.40
codegen_flags: <defaults>
</compile_context>

<pallas_src>
import functools
import math

import jax
import jax.numpy as jnp
from jax.experimental import pallas as pl
from jax.experimental.pallas import tpu as pltpu

COS_EPS = 1e-6
_NEG_BIG = -1e30  # finite "-inf" for masked log-softmax lanes


def _round_up(x, m):
    return (x + m - 1) // m * m


def _log_softmax_lastdim(z):
    m = jnp.max(z, axis=-1, keepdims=True)
    e = jnp.exp(z - m)
    return z - m - jnp.log(jnp.sum(e, axis=-1, keepdims=True))


def sgc_kernel(x_ref, w_ref, b_ref, ssf_ref, stats_ref,
               h_ref, out_ref, loss_ref, *, nssf, nclass):
    x = x_ref[...]          # (TM, nfeat)  bf16
    w = w_ref[...]          # (nfeat, S)   bf16 (zero lane-padded)
    b = b_ref[...]          # (1, S)       f32
    ssf = ssf_ref[...]      # (S, C)       bf16 (thresholded, zero padded)
    stats = stats_ref[...]  # (2, C)       f32: [||ssf_c||^2 ; 1/max(||ssf_c||,eps)]
    s_sq = stats[0:1, :]
    inv_sn = stats[1:2, :]

    # Linear + ReLU: bf16 MXU matmul, f32 accumulation. Padded cols stay 0.
    h = jnp.maximum(jnp.dot(x, w, preferred_element_type=jnp.float32) + b, 0.0)
    h_ref[...] = h[:, :nssf].astype(h_ref.dtype)          # true-width store

    # out = h @ ssf — inner products reused for cdist & cosine similarity.
    hs = jnp.dot(h.astype(ssf.dtype), ssf, preferred_element_type=jnp.float32)
    out_ref[...] = hs[:, :nclass].astype(out_ref.dtype)   # true-width store

    # Row squared norms (padded hidden columns contribute 0).
    h_sq = jnp.sum(h * h, axis=-1, keepdims=True)          # (TM, 1)

    # -cdist(h, ssf.T, p=2): sqrt(||h||^2 + ||ssf_c||^2 - 2 h.ssf_c)
    d2 = jnp.maximum(h_sq + s_sq - 2.0 * hs, 0.0)
    spatial_dist = -jnp.sqrt(d2)

    # Cosine similarity: per-norm eps clamping (PyTorch semantics); rsqrt on EUP.
    inv_hn = jax.lax.rsqrt(jnp.maximum(h_sq, COS_EPS * COS_EPS))
    spatial_sim = hs * inv_hn * inv_sn

    # Masked log-softmax over the real class lanes only.
    C = hs.shape[-1]
    lane = jax.lax.broadcasted_iota(jnp.int32, (1, C), 1)
    valid = lane < nclass
    dist_m = jnp.where(valid, spatial_dist, _NEG_BIG)
    sim_m = jnp.where(valid, spatial_sim, _NEG_BIG)

    loss = 0.5 * (_log_softmax_lastdim(dist_m) + _log_softmax_lastdim(sim_m))
    loss_ref[...] = loss[:, :nclass].astype(loss_ref.dtype)


def sgc_forward(x, w, b, subspace_filter, sigma, sp_rate, *, dataset="cora", tm=512):
    """Returns (out, ssf_thresholded, h, spatial_loss, sigma), mirroring SGC.forward."""
    assert dataset != "facebook" and not dataset.startswith("mag_")
    # TODO(synk): the 'facebook'/'mag_' branch (sigmoid / pairwise-distance path)
    # is not implemented; it is dead for the datasets exercised here.

    N, nfeat = x.shape
    nssf, nclass = subspace_filter.shape

    # --- parameter-side sparsification (tiny; plain-JAX glue) ---
    flat = jnp.abs(subspace_filter).reshape(-1)
    sorted_w = jnp.sort(flat)
    # clamp: sp_rate == 1.0 would index OOB in the PyTorch reference
    filter_idx = min(round(flat.shape[0] * sp_rate), flat.shape[0] - 1)
    threshold = sorted_w[filter_idx]
    ssf_t = jnp.where(jnp.abs(subspace_filter) >= threshold,
                      subspace_filter, 0.0).astype(jnp.float32)

    # --- lane-pad only the tiny parameter-side arrays; x stays unpadded ---
    S = _round_up(nssf, 128)             # hidden dim (MXU N of dot #1)
    C = _round_up(nclass, 128)           # class dim  (MXU N of dot #2)
    w_p = jnp.pad(w.astype(jnp.float32), ((0, 0), (0, S - nssf)))
    b_p = jnp.pad(b.astype(jnp.float32).reshape(1, nssf), ((0, 0), (0, S - nssf)))
    ssf_p = jnp.pad(ssf_t, ((0, S - nssf), (0, C - nclass)))

    # hoisted loop-invariant ssf statistics, packed into one (2, C) operand
    s_sq = jnp.sum(ssf_p * ssf_p, axis=0, keepdims=True)
    inv_sn = 1.0 / jnp.maximum(jnp.sqrt(s_sq), COS_EPS)
    stats = jnp.concatenate([s_sq, inv_sn], axis=0)            # (2, C) f32

    # bf16 matmul operands (f32 accumulation in-kernel).
    x_bf = x.astype(jnp.bfloat16)
    w_bf = w_p.astype(jnp.bfloat16)
    ssf_bf = ssf_p.astype(jnp.bfloat16)

    # --- row tiling: VMEM-budgeted, load-balanced, multiple-of-8 tile ---
    vmem_cap = 64 * 1024 * 1024                                # conservative (v7x)
    try:
        vmem_cap = int(pltpu.get_tpu_info().vmem_capacity_bytes)
    except Exception:
        pass
    vmem_limit = min(int(vmem_cap * 0.75), 112 * 1024 * 1024)

    def _vmem_needed(t):
        # double-buffered pipeline slots + rough f32 compute temporaries
        bufs = 2 * (t * nfeat * 2            # x tile (bf16)
                    + nfeat * S * 2          # W (bf16)
                    + 8 * S * 4              # bias (sublane padded)
                    + S * C * 2              # ssf (bf16)
                    + 8 * C * 4              # stats
                    + t * nssf * 4           # h out
                    + 2 * t * nclass * 4)    # out + loss
        temps = 2 * t * S * 4 + 5 * t * C * 4
        return bufs + temps

    tm_eff = max(8, min(tm, _round_up(N, 8)))
    while tm_eff > 8 and _vmem_needed(tm_eff) > int(vmem_limit * 0.85):
        tm_eff = max(8, _round_up(tm_eff // 2, 8))
    nt = pl.cdiv(N, tm_eff)
    tm_eff = min(tm_eff, _round_up(pl.cdiv(N, nt), 8))   # balance the ragged tail
    nt = pl.cdiv(N, tm_eff)                              # >=2 steps for graph-scale N (megacore)

    flops = 2 * N * nfeat * S + 2 * N * S * C + 30 * N * C
    bytes_accessed = (2 * N * nfeat + 2 * nfeat * S + 4 * S + 2 * S * C + 8 * C
                      + 4 * N * nssf + 8 * N * nclass)
    transcendentals = 6 * N * C

    kernel = functools.partial(sgc_kernel, nssf=nssf, nclass=nclass)

    h, out, spatial_loss = pl.pallas_call(
        kernel,
        out_shape=(
            jax.ShapeDtypeStruct((N, nssf), jnp.float32),    # h = relu(Wx+b)
            jax.ShapeDtypeStruct((N, nclass), jnp.float32),  # out = h @ ssf
            jax.ShapeDtypeStruct((N, nclass), jnp.float32),  # spatial_loss
        ),
        grid_spec=pltpu.PrefetchScalarGridSpec(
            num_scalar_prefetch=0,
            grid=(nt,),
            in_specs=[
                pl.BlockSpec((tm_eff, nfeat), lambda i: (i, 0)),   # x row tile (streamed)
                pl.BlockSpec((nfeat, S), lambda i: (0, 0)),        # W (grid-invariant)
                pl.BlockSpec((1, S), lambda i: (0, 0)),            # bias
                pl.BlockSpec((S, C), lambda i: (0, 0)),            # ssf (grid-invariant)
                pl.BlockSpec((2, C), lambda i: (0, 0)),            # packed ssf stats
            ],
            out_specs=[
                pl.BlockSpec((tm_eff, nssf), lambda i: (i, 0)),
                pl.BlockSpec((tm_eff, nclass), lambda i: (i, 0)),
                pl.BlockSpec((tm_eff, nclass), lambda i: (i, 0)),
            ],
        ),
        compiler_params=pltpu.CompilerParams(
            dimension_semantics=("parallel",),
            vmem_limit_bytes=vmem_limit,
        ),
        cost_estimate=pl.CostEstimate(
            flops=flops,
            transcendentals=transcendentals,
            bytes_accessed=bytes_accessed,
        ),
    )(x_bf, w_bf, b_p, ssf_bf, stats)
    # TODO(synk): for very large nfeat (>~8k) add a K-tile grid axis over nfeat with an
    # f32 accumulator in scratch instead of holding all of W resident (v7x 64 MiB VMEM).

    return out, ssf_t, h, spatial_loss, sigma


if __name__ == "__main__":
    # Small shapes consistent with the module: x is (num_nodes, nfeat)
    N, nfeat, nssf, nclass = 16, 32, 16, 8
    sp_rate = 0.5

    key = jax.random.PRNGKey(0)
    k1, k2, k3, k4 = jax.random.split(key, 4)
    x = jax.random.normal(k1, (N, nfeat), jnp.float32)
    # Deterministic synthetic parameters (shapes from SGC.__init__)
    w = jax.random.normal(k2, (nfeat, nssf), jnp.float32) * (1.0 / math.sqrt(nfeat))
    b = jax.random.normal(k3, (nssf,), jnp.float32) * 0.1
    subspace_filter = jax.random.normal(k4, (nssf, nclass), jnp.float32)
    sigma = jnp.ones((2,), jnp.float32)

    # jit the wrapper so the cast/pad/stat glue fuses into one graph with the kernel.
    fwd = jax.jit(functools.partial(sgc_forward, sp_rate=sp_rate, dataset="cora"))
    out, ssf_t, h, spatial_loss, sigma_out = fwd(x, w, b, subspace_filter, sigma)
    jax.block_until_ready((out, ssf_t, h, spatial_loss, sigma_out))

    assert out.shape == (N, nclass)
    assert ssf_t.shape == (nssf, nclass)
    assert h.shape == (N, nssf)
    assert spatial_loss.shape == (N, nclass)
    assert sigma_out.shape == (2,)
    assert bool(jnp.all(jnp.isfinite(out)))
    assert bool(jnp.all(jnp.isfinite(spatial_loss)))
    print("KERNEL_OK")
</pallas_src>

<mosaic_0001>
module attributes {stable_mosaic.version = 11 : i64} {
  func.func @sgc_kernel(%arg0: i32, %arg1: memref<16x32xbf16, #tpu.memory_space<vmem>>, %arg2: memref<32x128xbf16, #tpu.memory_space<vmem>>, %arg3: memref<1x128xf32, #tpu.memory_space<vmem>>, %arg4: memref<128x128xbf16, #tpu.memory_space<vmem>>, %arg5: memref<2x128xf32, #tpu.memory_space<vmem>>, %arg6: memref<16x16xf32, #tpu.memory_space<vmem>>, %arg7: memref<16x8xf32, #tpu.memory_space<vmem>>, %arg8: memref<16x8xf32, #tpu.memory_space<vmem>>) attributes {dimension_semantics = [#tpu.dimension_semantics<parallel>], iteration_bounds = array<i64: 1>, scalar_prefetch = 0 : i64, scratch_operands = 0 : i64, tpu.core_type = #tpu.core_type<tc>, window_params = [{transform_indices = @transform_0, window_bounds = array<i64: 16, 32>}, {pipeline_mode = #tpu.pipeline_mode<synchronous>, transform_indices = @transform_1, window_bounds = array<i64: 32, 128>}, {pipeline_mode = #tpu.pipeline_mode<synchronous>, transform_indices = @transform_2, window_bounds = array<i64: 1, 128>}, {pipeline_mode = #tpu.pipeline_mode<synchronous>, transform_indices = @transform_3, window_bounds = array<i64: 128, 128>}, {pipeline_mode = #tpu.pipeline_mode<synchronous>, transform_indices = @transform_4, window_bounds = array<i64: 2, 128>}, {transform_indices = @transform_5, window_bounds = array<i64: 16, 16>}, {transform_indices = @transform_6, window_bounds = array<i64: 16, 8>}, {transform_indices = @transform_7, window_bounds = array<i64: 16, 8>}]} {
    %c0 = arith.constant 0 : index
    %c0_0 = arith.constant 0 : index
    %0 = vector.load %arg1[%c0, %c0_0] : memref<16x32xbf16, #tpu.memory_space<vmem>>, vector<16x32xbf16>
    %c0_1 = arith.constant 0 : index
    %c0_2 = arith.constant 0 : index
    %1 = vector.load %arg2[%c0_1, %c0_2] : memref<32x128xbf16, #tpu.memory_space<vmem>>, vector<32x128xbf16>
    %c0_3 = arith.constant 0 : index
    %c0_4 = arith.constant 0 : index
    %2 = vector.load %arg3[%c0_3, %c0_4] : memref<1x128xf32, #tpu.memory_space<vmem>>, vector<1x128xf32>
    %c0_5 = arith.constant 0 : index
    %c0_6 = arith.constant 0 : index
    %3 = vector.load %arg4[%c0_5, %c0_6] : memref<128x128xbf16, #tpu.memory_space<vmem>>, vector<128x128xbf16>
    %c0_7 = arith.constant 0 : index
    %c0_8 = arith.constant 0 : index
    %4 = vector.load %arg5[%c0_7, %c0_8] : memref<2x128xf32, #tpu.memory_space<vmem>>, vector<2x128xf32>
    %5 = vector.extract_strided_slice %4 {offsets = [0, 0], sizes = [1, 128], strides = [1, 1]} : vector<2x128xf32> to vector<1x128xf32>
    %6 = vector.extract_strided_slice %4 {offsets = [1, 0], sizes = [1, 128], strides = [1, 1]} : vector<2x128xf32> to vector<1x128xf32>
    %cst = arith.constant dense<0.000000e+00> : vector<16x128xf32>
    %7 = tpu.matmul %0, %1, %cst {dimension_numbers = #tpu.dot_dimension_numbers<[1], [0], [0], [1], [0, 0, 1, 1], [], []>} : vector<16x32xbf16>, vector<32x128xbf16>, vector<16x128xf32> -> vector<16x128xf32>
    %8 = vector.broadcast %2 : vector<1x128xf32> to vector<16x128xf32>
    %9 = arith.addf %7, %8 : vector<16x128xf32>
    %cst_9 = arith.constant 0.000000e+00 : f32
    %10 = vector.broadcast %cst_9 : f32 to vector<16x128xf32>
    %11 = arith.maximumf %9, %10 : vector<16x128xf32>
    %12 = vector.extract_strided_slice %11 {offsets = [0, 0], sizes = [16, 16], strides = [1, 1]} : vector<16x128xf32> to vector<16x16xf32>
    %c0_10 = arith.constant 0 : index
    %c0_11 = arith.constant 0 : index
    %13 = vector.load %arg6[%c0_10, %c0_11] : memref<16x16xf32, #tpu.memory_space<vmem>>, vector<16x16xf32>
    tpu.vector_store %arg6[%c0_10, %c0_11], %12 {strides = array<i32>} : memref<16x16xf32, #tpu.memory_space<vmem>>, vector<16x16xf32>,
    %14 = arith.truncf %11 : vector<16x128xf32> to vector<16x128xbf16>
    %cst_12 = arith.constant dense<0.000000e+00> : vector<16x128xf32>
    %15 = tpu.matmul %14, %3, %cst_12 {dimension_numbers = #tpu.dot_dimension_numbers<[1], [0], [0], [1], [0, 0, 1, 1], [], []>} : vector<16x128xbf16>, vector<128x128xbf16>, vector<16x128xf32> -> vector<16x128xf32>
    %16 = vector.extract_strided_slice %15 {offsets = [0, 0], sizes = [16, 8], strides = [1, 1]} : vector<16x128xf32> to vector<16x8xf32>
    %c0_13 = arith.constant 0 : index
    %c0_14 = arith.constant 0 : index
    %17 = vector.load %arg7[%c0_13, %c0_14] : memref<16x8xf32, #tpu.memory_space<vmem>>, vector<16x8xf32>
    tpu.vector_store %arg7[%c0_13, %c0_14], %16 {strides = array<i32>} : memref<16x8xf32, #tpu.memory_space<vmem>>, vector<16x8xf32>,
    %18 = arith.mulf %11, %11 : vector<16x128xf32>
    %cst_15 = arith.constant dense<0.000000e+00> : vector<16xf32>
    %19 = vector.multi_reduction <add>, %18, %cst_15 [1] : vector<16x128xf32> to vector<16xf32>
    %20 = vector.shape_cast %19 : vector<16xf32> to vector<16x1xf32>
    %21 = vector.broadcast %20 : vector<16x1xf32> to vector<16x128xf32>
    %22 = vector.broadcast %5 : vector<1x128xf32> to vector<16x128xf32>
    %23 = arith.addf %21, %22 : vector<16x128xf32>
    %cst_16 = arith.constant 2.000000e+00 : f32
    %24 = vector.broadcast %cst_16 : f32 to vector<16x128xf32>
    %25 = arith.mulf %24, %15 : vector<16x128xf32>
    %26 = arith.subf %23, %25 : vector<16x128xf32>
    %cst_17 = arith.constant 0.000000e+00 : f32
    %27 = vector.broadcast %cst_17 : f32 to vector<16x128xf32>
    %28 = arith.maximumf %26, %27 : vector<16x128xf32>
    %29 = math.sqrt %28 : vector<16x128xf32>
    %cst_18 = arith.constant 0.000000e+00 : f32
    %30 = vector.broadcast %cst_18 : f32 to vector<16x128xf32>
    %31 = arith.subf %30, %29 : vector<16x128xf32>
    %cst_19 = arith.constant 9.99999996E-13 : f32
    %32 = vector.broadcast %cst_19 : f32 to vector<16x1xf32>
    %33 = arith.maximumf %20, %32 : vector<16x1xf32>
    %34 = math.rsqrt %33 : vector<16x1xf32>
    %35 = vector.broadcast %34 : vector<16x1xf32> to vector<16x128xf32>
    %36 = arith.mulf %15, %35 : vector<16x128xf32>
    %37 = vector.broadcast %6 : vector<1x128xf32> to vector<16x128xf32>
    %38 = arith.mulf %36, %37 : vector<16x128xf32>
    %39 = tpu.iota {dimensions = array<i32: 1>} : vector<1x128xi32>
    %c8_i32 = arith.constant 8 : i32
    %40 = vector.broadcast %c8_i32 : i32 to vector<1x128xi32>
    %41 = arith.cmpi slt, %39, %40 : vector<1x128xi32>
    %cst_20 = arith.constant -1.000000e+30 : f32
    %42 = vector.shape_cast %41 : vector<1x128xi1> to vector<1x128xi1>
    %43 = vector.broadcast %42 : vector<1x128xi1> to vector<16x128xi1>
    %44 = vector.broadcast %cst_20 : f32 to vector<16x128xf32>
    %45 = arith.select %43, %31, %44 : vector<16x128xi1>, vector<16x128xf32>
    %cst_21 = arith.constant -1.000000e+30 : f32
    %46 = vector.shape_cast %41 : vector<1x128xi1> to vector<1x128xi1>
    %47 = vector.broadcast %46 : vector<1x128xi1> to vector<16x128xi1>
    %48 = vector.broadcast %cst_21 : f32 to vector<16x128xf32>
    %49 = arith.select %47, %38, %48 : vector<16x128xi1>, vector<16x128xf32>
    %cst_22 = arith.constant dense<0xFF800000> : vector<16xf32>
    %50 = vector.multi_reduction <maximumf>, %45, %cst_22 [1] : vector<16x128xf32> to vector<16xf32>
    %51 = vector.shape_cast %50 : vector<16xf32> to vector<16x1xf32>
    %52 = vector.broadcast %51 : vector<16x1xf32> to vector<16x128xf32>
    %53 = arith.subf %45, %52 : vector<16x128xf32>
    %54 = math.exp %53 : vector<16x128xf32>
    %55 = vector.broadcast %51 : vector<16x1xf32> to vector<16x128xf32>
    %56 = arith.subf %45, %55 : vector<16x128xf32>
    %cst_23 = arith.constant dense<0.000000e+00> : vector<16xf32>
    %57 = vector.multi_reduction <add>, %54, %cst_23 [1] : vector<16x128xf32> to vector<16xf32>
    %58 = vector.shape_cast %57 : vector<16xf32> to vector<16x1xf32>
    %59 = math.log %58 : vector<16x1xf32>
    %60 = vector.broadcast %59 : vector<16x1xf32> to vector<16x128xf32>
    %61 = arith.subf %56, %60 : vector<16x128xf32>
    %cst_24 = arith.constant dense<0xFF800000> : vector<16xf32>
    %62 = vector.multi_reduction <maximumf>, %49, %cst_24 [1] : vector<16x128xf32> to vector<16xf32>
    %63 = vector.shape_cast %62 : vector<16xf32> to vector<16x1xf32>
    %64 = vector.broadcast %63 : vector<16x1xf32> to vector<16x128xf32>
    %65 = arith.subf %49, %64 : vector<16x128xf32>
    %66 = math.exp %65 : vector<16x128xf32>
    %67 = vector.broadcast %63 : vector<16x1xf32> to vector<16x128xf32>
    %68 = arith.subf %49, %67 : vector<16x128xf32>
    %cst_25 = arith.constant dense<0.000000e+00> : vector<16xf32>
    %69 = vector.multi_reduction <add>, %66, %cst_25 [1] : vector<16x128xf32> to vector<16xf32>
    %70 = vector.shape_cast %69 : vector<16xf32> to vector<16x1xf32>
    %71 = math.log %70 : vector<16x1xf32>
    %72 = vector.broadcast %71 : vector<16x1xf32> to vector<16x128xf32>
    %73 = arith.subf %68, %72 : vector<16x128xf32>
    %74 = arith.addf %61, %73 : vector<16x128xf32>
    %cst_26 = arith.constant 5.000000e-01 : f32
    %75 = vector.broadcast %cst_26 : f32 to vector<16x128xf32>
    %76 = arith.mulf %75, %74 : vector<16x128xf32>
    %77 = vector.extract_strided_slice %76 {offsets = [0, 0], sizes = [16, 8], strides = [1, 1]} : vector<16x128xf32> to vector<16x8xf32>
    %c0_27 = arith.constant 0 : index
    %c0_28 = arith.constant 0 : index
    %78 = vector.load %arg8[%c0_27, %c0_28] : memref<16x8xf32, #tpu.memory_space<vmem>>, vector<16x8xf32>
    tpu.vector_store %arg8[%c0_27, %c0_28], %77 {strides = array<i32>} : memref<16x8xf32, #tpu.memory_space<vmem>>, vector<16x8xf32>,
    return
  }
  func.func @transform_0(%arg0: i32) -> (i32, i32) {
    %c0_i32 = arith.constant 0 : i32
    %c0_i32_0 = arith.constant 0 : i32
    return %arg0, %c0_i32 : i32, i32
  }
  func.func @transform_1(%arg0: i32) -> (i32, i32) {
    %c0_i32 = arith.constant 0 : i32
    %c0_i32_0 = arith.constant 0 : i32
    %c0_i32_1 = arith.constant 0 : i32
    return %c0_i32, %c0_i32_0 : i32, i32
  }
  func.func @transform_2(%arg0: i32) -> (i32, i32) {
    %c0_i32 = arith.constant 0 : i32
    %c0_i32_0 = arith.constant 0 : i32
    %c0_i32_1 = arith.constant 0 : i32
    return %c0_i32, %c0_i32_0 : i32, i32
  }
  func.func @transform_3(%arg0: i32) -> (i32, i32) {
    %c0_i32 = arith.constant 0 : i32
    %c0_i32_0 = arith.constant 0 : i32
    %c0_i32_1 = arith.constant 0 : i32
    return %c0_i32, %c0_i32_0 : i32, i32
  }
  func.func @transform_4(%arg0: i32) -> (i32, i32) {
    %c0_i32 = arith.constant 0 : i32
    %c0_i32_0 = arith.constant 0 : i32
    %c0_i32_1 = arith.constant 0 : i32
    return %c0_i32, %c0_i32_0 : i32, i32
  }
  func.func @transform_5(%arg0: i32) -> (i32, i32) {
    %c0_i32 = arith.constant 0 : i32
    %c0_i32_0 = arith.constant 0 : i32
    return %arg0, %c0_i32 : i32, i32
  }
  func.func @transform_6(%arg0: i32) -> (i32, i32) {
    %c0_i32 = arith.constant 0 : i32
    %c0_i32_0 = arith.constant 0 : i32
    return %arg0, %c0_i32 : i32, i32
  }
  func.func @transform_7(%arg0: i32) -> (i32, i32) {
    %c0_i32 = arith.constant 0 : i32
    %c0_i32_0 = arith.constant 0 : i32
    return %arg0, %c0_i32 : i32, i32
  }
}

</mosaic_0001>

<llo_original>
// kernel: sgc_forward.1
$region0: #{sgc_forward.1}
  #allocation0 [shape = 'u32[]', space=smem, size = 0x4, offset = 0x4, fixed_abs, tag = 'smem constant byte address 0x4 - core index']
  #allocation1 [shape = 'u32[144,128]{1,0:T(1,128)}', space=vmem, size = 0x12000, scoped, tag = 'internal scratch']
  %s0 = inlined_call_operand.vmem [shape: bf16[16,32], index: 0, kind: input, shape index: {}]
  %s1 = inlined_call_operand.vmem [shape: bf16[32,128], index: 1, kind: input, shape index: {}]
  %s2 = inlined_call_operand.vmem [shape: f32[1,128], index: 2, kind: input, shape index: {}]
  %s3 = inlined_call_operand.vmem [shape: bf16[128,128], index: 3, kind: input, shape index: {}]
  %s4 = inlined_call_operand.vmem [shape: f32[2,128], index: 4, kind: input, shape index: {}]
  %s5 = inlined_call_operand.hbm [shape: f32[16,16], index: 5, kind: output, shape index: {0}]
  %s6 = inlined_call_operand.vmem [shape: f32[16,8], index: 6, kind: output, shape index: {1}]
  %s7 = inlined_call_operand.vmem [shape: f32[16,8], index: 7, kind: output, shape index: {2}]
  %8 = xla_tuple %s5, %s6, %s7
  %s9 = sld [smem:[#allocation0]]
  $region46: #{sgc_forward.1} parent=0
    _
  %s11 = ssub.s32 1, %s9
  %s12 = scalar_select 0, %s11, %s9
  $region1: #{sgc_forward.1} parent=0
    #allocation2 [shape = 'u8[8192]{0}', space=vmem, size = 0x2000, scoped, tag = 'output window, operand 0, single buffered']
    #allocation3 [shape = 's32[1]{0}', space=sflag, size = 0x4, scoped, tag = 'scoped memory for sgc_forward.1']
    %13 = vsyncpa [#allocation3], 0
    // Predicated region
    $region2: #{sgc_forward.1} parent=1 // pred_check
      _
    $region3: #{sgc_forward.1} parent=1 // pred_check_branch
      %15 = sbr.rel (0) target = $region5
    $region4: #{sgc_forward.1} parent=1 // pred_region
      _
    $region5: #{sgc_forward.1} parent=1 // pred_fallthru
      _
    // Predicated region
    $region6: #{sgc_forward.1} parent=1 // pred_check
      _
    $region7: #{sgc_forward.1} parent=1 // pred_check_branch
      %17 = sbr.rel (0) target = $region9
    $region8: #{sgc_forward.1} parent=1 // pred_region
      _
    $region9: #{sgc_forward.1} parent=1 // pred_fallthru
      _
    // Predicated region
    $region10: #{sgc_forward.1} parent=1 // pred_check
      _
    $region11: #{sgc_forward.1} parent=1 // pred_check_branch
      %19 = sbr.rel (0) target = $region13
    $region12: #{sgc_forward.1} parent=1 // pred_region
      _
    $region13: #{sgc_forward.1} parent=1 // pred_fallthru
      _
    // Predicated region
    $region14: #{sgc_forward.1} parent=1 // pred_check
      _
    $region15: #{sgc_forward.1} parent=1 // pred_check_branch
      %21 = sbr.rel (0) target = $region17
    $region16: #{sgc_forward.1} parent=1 // pred_region
      _
    $region17: #{sgc_forward.1} parent=1 // pred_fallthru
      _
    // Predicated region
    $region18: #{sgc_forward.1} parent=1 // pred_check
      _
    $region19: #{sgc_forward.1} parent=1 // pred_check_branch
      %23 = sbr.rel (0) target = $region21
    $region20: #{sgc_forward.1} parent=1 // pred_region
      _
    $region21: #{sgc_forward.1} parent=1 // pred_fallthru
      _
    %v25 = vld [vmem:[%s0] sm:$0xf]
    %v26 = vld [vmem:[%s0 + $0x4] sm:$0xf]
    %v27 = vld [vmem:[%s1] sm:$0xf]
    %v28 = vld [vmem:[%s1 + $0x4] sm:$0xf]
    %v29 = vld [vmem:[%s1 + $0x8] sm:$0xf]
    %v30 = vld [vmem:[%s1 + $0xc] sm:$0xf]
    %v31 = vld [vmem:[%s2] sm:$0x1]
    %v32 = vld [vmem:[%s3] sm:$0xf]
    %v33 = vld [vmem:[%s3 + $0x4] sm:$0xf]
    %v34 = vld [vmem:[%s3 + $0x8] sm:$0xf]
    %v35 = vld [vmem:[%s3 + $0xc] sm:$0xf]
    %v36 = vld [vmem:[%s3 + $0x10] sm:$0xf]
    %v37 = vld [vmem:[%s3 + $0x14] sm:$0xf]
    %v38 = vld [vmem:[%s3 + $0x18] sm:$0xf]
    %v39 = vld [vmem:[%s3 + $0x1c] sm:$0xf]
    %v40 = vld [vmem:[%s3 + $0x20] sm:$0xf]
    %v41 = vld [vmem:[%s3 + $0x24] sm:$0xf]
    %v42 = vld [vmem:[%s3 + $0x28] sm:$0xf]
    %v43 = vld [vmem:[%s3 + $0x2c] sm:$0xf]
    %v44 = vld [vmem:[%s3 + $0x30] sm:$0xf]
    %v45 = vld [vmem:[%s3 + $0x34] sm:$0xf]
    %v46 = vld [vmem:[%s3 + $0x38] sm:$0xf]
    %v47 = vld [vmem:[%s3 + $0x3c] sm:$0xf]
    %v48 = vld [vmem:[%s4] sm:$0x3]
    %v50 = vlaneseq
    %v51 = vshrl.u32 %v50, 7
    %v52 = vsub.s32 0, %v51
    %v53 = vrot.slane %v31, %v52
    %v57 = vunpack.c.l.b16 %v25
    %v58 = vunpack.c.l.b16 %v26
    %v59 = vpack.c.b16 %v58, %v57
    %v64 = vunpack.c.l.b16 %v27
    %v65 = vunpack.c.l.b16 %v28
    %v66 = vunpack.c.l.b16 %v29
    %v67 = vunpack.c.l.b16 %v30
    %v68 = vpack.c.b16 %v65, %v64
    %v69 = vpack.c.b16 %v67, %v66
    %vm72 = vcmask 261120
    %v74 = vsel %vm72, %v59, 0
    %76 = vmatprep.subr.bf16.mxu0 0
    %77 = vmatpush1.bf16.msra.mxu0 %v68
    %78 = vmatprep.subr.bf16.mxu0 0
    %79 = vmatpush1.bf16.msra.mxu0 %v69
    %80 = vmatprep.subr.bf16.mxu0 0
    %81 = vmatpush1.bf16.msra.mxu0 0
    %82 = vmatprep.subr.bf16.mxu0 0
    %83 = vmatpush1.bf16.msra.mxu0 0
    %84 = vmatprep.subr.bf16.mxu0 0
    %85 = vmatpush1.bf16.msra.mxu0 0
    %86 = vmatprep.subr.bf16.mxu0 0
    %87 = vmatpush1.bf16.msra.mxu0 0
    %88 = vmatprep.subr.bf16.mxu0 0
    %89 = vmatpush1.bf16.msra.mxu0 0
    %90 = vmatprep.subr.bf16.mxu0 0
    %91 = vmatpush1.bf16.msra.mxu0 0
    %92 = vmatprep.subr.bf16.mxu0 0
    %93 = vmatpush1.bf16.msra.mxu0 0
    %94 = vmatprep.subr.bf16.mxu0 0
    %95 = vmatpush1.bf16.msra.mxu0 0
    %96 = vmatprep.subr.bf16.mxu0 0
    %97 = vmatpush1.bf16.msra.mxu0 0
    %98 = vmatprep.subr.bf16.mxu0 0
    %99 = vmatpush1.bf16.msra.mxu0 0
    %100 = vmatprep.subr.bf16.mxu0 0
    %101 = vmatpush1.bf16.msra.mxu0 0
    %102 = vmatprep.subr.bf16.mxu0 0
    %103 = vmatpush1.bf16.msra.mxu0 0
    %104 = vmatprep.subr.bf16.mxu0 0
    %105 = vmatpush1.bf16.msra.mxu0 0
    %106 = vmatprep.subr.bf16.mxu0 0
    %107 = vmatpush1.bf16.msra.mxu0 0
    %108 = vmatprep.mubr.bf16.mxu0 0
    %109 = vmatmul.mubr.bf16.gmra.mrb[0].mxu0 %v74
    %v110 = vpop.f32.mrb[0].mxu0
    %v111 = vadd.f32 %v53, %v110
    %v112 = vpop.f32.mrb[0].mxu0
    %v113 = vpop.f32.mrb[0].mxu0
    %v114 = vadd.f32 %v53, %v113
    %v115 = vpop.f32.mrb[0].mxu0
    %116 = vdwg.mxu0
    %v117 = vmax.f32 %v111, 0.0
    %v118 = vmax.f32 %v114, 0.0
    %vm119 = vcmask 130048
    %120 = vst.msk [vmem:[#allocation2] sm:$0xff] %vm119, %v117
    %121 = vst.msk [vmem:[#allocation2 + $0x8] sm:$0xff] %vm119, %v118
    %v122 = vpack.c.bf16 %v118, %v117
    %v139 = vunpack.c.l.b16 %v32
    %v140 = vunpack.c.l.b16 %v33
    %v141 = vunpack.c.l.b16 %v34
    %v142 = vunpack.c.l.b16 %v35
    %v143 = vunpack.c.l.b16 %v36
    %v144 = vunpack.c.l.b16 %v37
    %v145 = vunpack.c.l.b16 %v38
    %v146 = vunpack.c.l.b16 %v39
    %v147 = vunpack.c.l.b16 %v40
    %v148 = vunpack.c.l.b16 %v41
    %v149 = vunpack.c.l.b16 %v42
    %v150 = vunpack.c.l.b16 %v43
    %v151 = vunpack.c.l.b16 %v44
    %v152 = vunpack.c.l.b16 %v45
    %v153 = vunpack.c.l.b16 %v46
    %v154 = vunpack.c.l.b16 %v47
    %v155 = vpack.c.b16 %v140, %v139
    %v156 = vpack.c.b16 %v142, %v141
    %v157 = vpack.c.b16 %v144, %v143
    %v158 = vpack.c.b16 %v146, %v145
    %v159 = vpack.c.b16 %v148, %v147
    %v160 = vpack.c.b16 %v150, %v149
    %v161 = vpack.c.b16 %v152, %v151
    %v162 = vpack.c.b16 %v154, %v153
    %171 = vmatprep.subr.bf16.mxu0 0
    %172 = vmatpush1.bf16.msra.mxu0 %v155
    %173 = vmatprep.subr.bf16.mxu0 0
    %174 = vmatpush1.bf16.msra.mxu0 %v156
    %175 = vmatprep.subr.bf16.mxu0 0
    %176 = vmatpush1.bf16.msra.mxu0 %v157
    %177 = vmatprep.subr.bf16.mxu0 0
    %178 = vmatpush1.bf16.msra.mxu0 %v158
    %179 = vmatprep.subr.bf16.mxu0 0
    %180 = vmatpush1.bf16.msra.mxu0 %v159
    %181 = vmatprep.subr.bf16.mxu0 0
    %182 = vmatpush1.bf16.msra.mxu0 %v160
    %183 = vmatprep.subr.bf16.mxu0 0
    %184 = vmatpush1.bf16.msra.mxu0 %v161
    %185 = vmatprep.subr.bf16.mxu0 0
    %186 = vmatpush1.bf16.msra.mxu0 %v162
    %187 = vmatprep.subr.bf16.mxu0 0
    %188 = vmatpush1.bf16.msra.mxu0 0
    %189 = vmatprep.subr.bf16.mxu0 0
    %190 = vmatpush1.bf16.msra.mxu0 0
    %191 = vmatprep.subr.bf16.mxu0 0
    %192 = vmatpush1.bf16.msra.mxu0 0
    %193 = vmatprep.subr.bf16.mxu0 0
    %194 = vmatpush1.bf16.msra.mxu0 0
    %195 = vmatprep.subr.bf16.mxu0 0
    %196 = vmatpush1.bf16.msra.mxu0 0
    %197 = vmatprep.subr.bf16.mxu0 0
    %198 = vmatpush1.bf16.msra.mxu0 0
    %199 = vmatprep.subr.bf16.mxu0 0
    %200 = vmatpush1.bf16.msra.mxu0 0
    %201 = vmatprep.subr.bf16.mxu0 0
    %202 = vmatpush1.bf16.msra.mxu0 0
    %203 = vmatprep.mubr.bf16.mxu0 0
    %204 = vmatmul.mubr.bf16.gmra.mrb[0].mxu0 %v122
    %v205 = vpop.f32.mrb[0].mxu0
    %v206 = vadd.f32 0.0, %v205
    %v207 = vpop.f32.mrb[0].mxu0
    %v208 = vpop.f32.mrb[0].mxu0
    %v209 = vadd.f32 0.0, %v208
    %v210 = vpop.f32.mrb[0].mxu0
    %211 = vdwg.mxu0
    %vm212 = vcmask 64512
    %213 = vst.msk [vmem:[%s6] sm:$0xff] %vm212, %v206
    %214 = vst.msk [vmem:[%s6 + $0x8] sm:$0xff] %vm212, %v209
    %v215 = vmul.f32 %v117, %v117
    %v216 = vmul.f32 %v118, %v118
    %217 = vadd.xlane.f32.xlu0 %v215
    %v218 = vpop.xlane.xlu0 %217
    %219 = vadd.xlane.f32.xlu0 %v216
    %v220 = vpop.xlane.xlu0 %219
    %v221 = vlaneseq
    %v222 = vshrl.u32 %v221, 7
    %v223 = vsub.s32 0, %v222
    %v224 = vrot.slane %v48, %v223
    %v225 = vadd.f32 %v218, %v224
    %v226 = vadd.f32 %v220, %v224
    %v227 = vmul.f32 %v206, 2.0
    %v228 = vmul.f32 %v209, 2.0
    %v229 = vsub.f32 %v225, %v227
    %v230 = vsub.f32 %v226, %v228
    %v231 = vmax.f32 %v229, 0.0
    %v232 = vmax.f32 %v230, 0.0
    %v233 = vrsqrt.pop %v231
    %v234 = vmul.f32 %v231, %v233
    %vm235 = vcmp.eq.f32.partialorder %v231, inf
    %v236 = vsel %vm235, %v231, %v234
    %vm237 = vcmp.eq.f32.partialorder %v231, 0.0
    %v238 = vand.u32 %v231, 2147483648
    %v239 = vsel %vm237, %v238, %v236
    %v240 = vrsqrt.pop %v232
    %v241 = vmul.f32 %v232, %v240
    %vm242 = vcmp.eq.f32.partialorder %v232, inf
    %v243 = vsel %vm242, %v232, %v241
    %vm244 = vcmp.eq.f32.partialorder %v232, 0.0
    %v245 = vand.u32 %v232, 2147483648
    %v246 = vsel %vm244, %v245, %v243
    %v247 = vsub.f32 0.0, %v239
    %v248 = vsub.f32 0.0, %v246
    %v249 = vmax.f32 %v218, 1e-12
    %v250 = vmax.f32 %v220, 1e-12
    %v251 = vrsqrt.pop %v249
    %v252 = vrsqrt.pop %v250
    %v253 = vmul.f32 %v206, %v251
    %v254 = vmul.f32 %v209, %v252
    %v255 = vlaneseq
    %v256 = vshrl.u32 %v255, 7
    %v257 = vsub.s32 1, %v256
    %v258 = vrot.slane %v48, %v257
    %v259 = vmul.f32 %v253, %v258
    %v260 = vmul.f32 %v254, %v258
    %v261 = vlaneseq
    %v262 = vand.u32 %v261, 127
    %vm263 = vcmp.lt.s32.totalorder %v262, 8
    %v264 = vsel %vm263, 1, 0
    %vm265 = vcmp.eq.s32.totalorder %v264, 1
    %v266 = vsel %vm265, %v247, -1e+30
    %v267 = vsel %vm265, %v248, -1e+30
    %v268 = vsel %vm265, %v259, -1e+30
    %v269 = vsel %vm265, %v260, -1e+30
    %270 = vmax.xlane.f32.xlu0 %v266
    %v271 = vpop.xlane.xlu0 %270
    %272 = vmax.xlane.f32.xlu0 %v267
    %v273 = vpop.xlane.xlu0 %272
    %v274 = vsub.f32 %v266, %v271
    %v275 = vsub.f32 %v267, %v273
    %v276 = vmul.f32 %v274, 1.442695
    %v277 = vpow.pop %v276
    %v278 = vmul.f32 %v275, 1.442695
    %v279 = vpow.pop %v278
    %280 = vadd.xlane.f32.xlu0 %v277
    %v281 = vpop.xlane.xlu0 %280
    %282 = vadd.xlane.f32.xlu0 %v279
    %v283 = vpop.xlane.xlu0 %282
    %v284 = vlog2.pop %v281
    %v285 = vmul.f32 %v284, 0.6931472
    %v286 = vlog2.pop %v283
    %v287 = vmul.f32 %v286, 0.6931472
    %v288 = vsub.f32 %v274, %v285
    %v289 = vsub.f32 %v275, %v287
    %290 = vmax.xlane.f32.xlu0 %v268
    %v291 = vpop.xlane.xlu0 %290
    %292 = vmax.xlane.f32.xlu0 %v269
    %v293 = vpop.xlane.xlu0 %292
    %v294 = vsub.f32 %v268, %v291
    %v295 = vsub.f32 %v269, %v293
    %v296 = vmul.f32 %v294, 1.442695
    %v297 = vpow.pop %v296
    %v298 = vmul.f32 %v295, 1.442695
    %v299 = vpow.pop %v298
    %300 = vadd.xlane.f32.xlu0 %v297
    %v301 = vpop.xlane.xlu0 %300
    %302 = vadd.xlane.f32.xlu0 %v299
    %v303 = vpop.xlane.xlu0 %302
    %v304 = vlog2.pop %v301
    %v305 = vmul.f32 %v304, 0.6931472
    %v306 = vlog2.pop %v303
    %v307 = vmul.f32 %v306, 0.6931472
    %v308 = vsub.f32 %v294, %v305
    %v309 = vsub.f32 %v295, %v307
    %v310 = vadd.f32 %v288, %v308
    %v311 = vadd.f32 %v289, %v309
    %v312 = vmul.f32 %v310, 0.5
    %v313 = vmul.f32 %v311, 0.5
    %314 = vst.msk [vmem:[%s7] sm:$0xff] %vm212, %v312
    %315 = vst.msk [vmem:[%s7 + $0x8] sm:$0xff] %vm212, %v313
    // Predicated region
    $region22: #{sgc_forward.1} parent=1 // pred_check
      _
    $region23: #{sgc_forward.1} parent=1 // pred_check_branch
      %317 = sbr.rel (0) target = $region25
    $region24: #{sgc_forward.1} parent=1 // pred_region
      %s319 = ssub.s32 256, 256
      %320 = vsyncadd [#allocation3], %s319
      %s321 = sshll.u32 [#allocation2], 4
      %s322 = int_to_ptr.vmem [resolvable:$true] %s321
      %327 = dma.vmem_to_hbm [thread:$0]  %s322, 256, %s5, [#allocation3], 128, 128, 8
    $region25: #{sgc_forward.1} parent=1 // pred_fallthru
      _
    // Predicated region
    $region26: #{sgc_forward.1} parent=1 // pred_check
      _
    $region27: #{sgc_forward.1} parent=1 // pred_check_branch
      %329 = sbr.rel (0) target = $region29
    $region28: #{sgc_forward.1} parent=1 // pred_region
      _
    $region29: #{sgc_forward.1} parent=1 // pred_fallthru
      _
    // Predicated region
    $region30: #{sgc_forward.1} parent=1 // pred_check
      _
    $region31: #{sgc_forward.1} parent=1 // pred_check_branch
      %331 = sbr.rel (0) target = $region33
    $region32: #{sgc_forward.1} parent=1 // pred_region
      _
    $region33: #{sgc_forward.1} parent=1 // pred_fallthru
      _
    // Predicated region
    $region34: #{sgc_forward.1} parent=1 // pred_check
      _
    $region35: #{sgc_forward.1} parent=1 // pred_check_branch
      %333 = sbr.rel (0) target = $region37
    $region36: #{sgc_forward.1} parent=1 // pred_region
      %334 = dma.done [#allocation3], 256
    $region37: #{sgc_forward.1} parent=1 // pred_fallthru
      _
    // Predicated region
    $region38: #{sgc_forward.1} parent=1 // pred_check
      _
    $region39: #{sgc_forward.1} parent=1 // pred_check_branch
      %336 = sbr.rel (0) target = $region41
    $region40: #{sgc_forward.1} parent=1 // pred_region
      _
    $region41: #{sgc_forward.1} parent=1 // pred_fallthru
      _
    // Predicated region
    $region42: #{sgc_forward.1} parent=1 // pred_check
      _
    $region43: #{sgc_forward.1} parent=1 // pred_check_branch
      %338 = sbr.rel (0) target = $region45
    $region44: #{sgc_forward.1} parent=1 // pred_region
      _
    $region45: #{sgc_forward.1} parent=1 // pred_fallthru
      _
    %339 = vsyncpa [#allocation3], 1

</llo_original>
